<compile_context>
chip_gen: v5e
topology: v5e:2x2
jax: 0.10.0
libtpu: 0.0.40
codegen_flags: <defaults>
</compile_context>

<pallas_src>
import math

import numpy as np
import jax
import jax.numpy as jnp
from jax.experimental import pallas as pl
from jax.experimental.pallas import tpu as pltpu

# (name, in_features, out_features) — original PyTorch layers.
LAYERS = [
    ("f_up_l1", 2, 2), ("f_up_l2", 2, 2),
    ("k_up_l1", 4, 4), ("k_up_l2", 4, 4),
    ("h_up_l1", 6, 6), ("h_up_l2", 6, 6),
    ("m_down_l1", 17, 16), ("m_down_l2", 16, 16),
    ("m_down_l2_1", 16, 6), ("m_down_l2_2", 16, 6),
    ("h_down_l1", 6, 6), ("h_down_l2", 6, 6),
    ("k_down_l1", 6, 4), ("k_down_l2", 4, 4),
    ("h_act_l1", 8, 4), ("h_act_l2", 4, 1),
    ("k_act_l1", 8, 4), ("k_act_l2", 4, 1),
    ("f_act_l1", 6, 4), ("f_act_l2", 4, 1),
    ("xf_up_l1", 2, 2), ("xf_up_l2", 2, 2),
    ("xk_up_l1", 4, 4), ("xk_up_l2", 4, 4),
    ("xh_up_l1", 6, 6), ("xh_up_l2", 6, 6),
    ("xh_down_l1", 6, 6), ("xh_down_l2", 6, 6),
    ("xk_down_l1", 6, 4), ("xk_down_l2", 4, 4),
    ("xh_act_l1", 8, 4), ("xh_act_l2", 4, 1),
    ("xk_act_l1", 8, 4), ("xk_act_l2", 4, 1),
    ("xf_act_l1", 6, 4), ("xf_act_l2", 4, 1),
]

PW = 32          # padded feature width (sublane axis of every activation)
NXDOT = 5        # number of 32-row blocks in the stacked x-dot weight
NC = 16          # number of chain dots
NX = 17          # raw input feature width
CONST = 31       # row carrying the constant 1.0 (bias lane)
BT_MAX = 2048    # max batch-tile (lanes) per grid step


def _round_up(n, m):
    return ((n + m - 1) // m) * m


def _cdiv(a, b):
    return -(-a // b)


# --------------------------------------------------------------------------
# Kernel: feature-major PNet.  act[32, bt] with batch on the lane axis.
# --------------------------------------------------------------------------
def pnet_kernel(x_ref, wx_ref, wc_ref, out_ref):
    x32 = x_ref[...]                                   # [32, bt]; row 31 == 1.0

    relu = lambda v: jnp.maximum(v, 0.0)

    def cdot(i, act):
        return jnp.dot(wc_ref[i], act, preferred_element_type=jnp.float32)

    # Single stacked MXU pass for every dot that consumes x (off the chain).
    xa = jnp.dot(wx_ref[...], x32, preferred_element_type=jnp.float32)  # [160, bt]
    xa_f = xa[0 * PW:1 * PW]      # stage 1  pre-act (f_up_l1 | xf_up_l1) + bias
    xa_k = xa[1 * PW:2 * PW]      # stage 3  x-part  (k_up_l1 | xk_up_l1) + bias
    xa_h = xa[2 * PW:3 * PW]      # stage 5  x-part  (h_up_l1 | xh_up_l1) + bias
    xa_m = xa[3 * PW:4 * PW]      # stage 7  x-part  (m_down_l1)          + bias
    xa_a = xa[4 * PW:5 * PW]      # stage 14 x-part  (six *_act_l1 heads) + bias

    # Serial chain.  All biases live in weight column 31 (constant lane).
    a1 = relu(xa_f)                                  # f_up_l1  | xf_up_l1
    a2 = relu(cdot(0, a1))                           # f_up_l2  | xf_up_l2
    a3 = relu(xa_k + cdot(1, a2))                    # k_up_l1  | xk_up_l1
    a4 = relu(cdot(2, a3))                           # k_up_l2  | xk_up_l2
    a5 = relu(xa_h + cdot(3, a4))                    # h_up_l1  | xh_up_l1
    a6 = relu(cdot(4, a5))                           # h_up_l2  | xh_up_l2
    a7 = relu(xa_m + cdot(5, a6))                    # m_down_l1
    a8 = relu(cdot(6, a7))                           # m_down_l2
    a9 = relu(cdot(7, a8))                           # m_down_l2_1 | m_down_l2_2
    a10 = jnp.tanh(cdot(8, a9))                      # h_down_l1 | xh_down_l1
    a11 = relu(cdot(9, a10))                         # h_down_l2 | xh_down_l2
    a12 = jnp.tanh(cdot(10, a11))                    # k_down_l1 | xk_down_l1
    a13 = relu(cdot(11, a12))                        # k_down_l2 | xk_down_l2
    a14 = relu(xa_a + cdot(12, a9) + cdot(13, a11) + cdot(14, a13))  # *_act_l1
    y = cdot(15, a14)                                # *_act_l2 -> rows 0..5

    out_ref[...] = y[:8, :]                          # lane-dense store


# --------------------------------------------------------------------------
# Host-side parameter handling.
# --------------------------------------------------------------------------
def init_params(key):
    """Deterministic synthetic init mirroring the PyTorch module:
    xavier_uniform weights [out, in], torch-default uniform biases [out]."""
    params = {}
    for name, fin, fout in LAYERS:
        key, kw, kb = jax.random.split(key, 3)
        limit = math.sqrt(6.0 / (fin + fout))
        w = jax.random.uniform(kw, (fout, fin), jnp.float32, -limit, limit)
        bound = 1.0 / math.sqrt(fin)
        b = jax.random.uniform(kb, (fout,), jnp.float32, -bound, bound)
        params[name] = (w, b)
    return params


def pack_params(params):
    """Pack the 36 Linear layers into the two feature-major weight slabs.

    wx  [5*32, 32]: stacked weights of the dots that consume x directly.
    wc  [16, 32, 32]: chain dots.
    Entry [out_row, in_row] = W_layer[out, in]; biases go into column CONST
    (the x constant-1 row), scaled by the value of the constant carried by
    that stage's input (1.0 everywhere except after the tanh stages, where it
    is tanh(1)).  Unused rows/cols stay zero so padded lanes stay exactly zero.
    """
    W = {n: np.asarray(w, np.float32) for n, (w, b) in params.items()}
    Bv = {n: np.asarray(b, np.float32) for n, (w, b) in params.items()}
    C = float(np.tanh(1.0))           # constant value after a tanh stage

    wx = np.zeros((NXDOT * PW, PW), np.float32)
    wc = np.zeros((NC, PW, PW), np.float32)

    def put_x(block, layer, x_rows, out0, in_subset=None):
        w = W[layer]
        if in_subset is None:
            in_subset = range(w.shape[1])
        base = block * PW + out0
        for r, j in zip(x_rows, in_subset):
            wx[base:base + w.shape[0], r] = w[:, j]

    def put_c(dot, layer, in_rows, out0, in_subset=None):
        w = W[layer]
        if in_subset is None:
            in_subset = range(w.shape[1])
        for r, j in zip(in_rows, in_subset):
            wc[dot, out0:out0 + w.shape[0], r] = w[:, j]

    def bias_x(block, layer, out0, div=1.0):
        b = Bv[layer]
        base = block * PW + out0
        wx[base:base + b.shape[0], CONST] = b / div

    def bias_c(dot, layer, out0, div=1.0):
        b = Bv[layer]
        wc[dot, out0:out0 + b.shape[0], CONST] = b / div

    # ---- stacked x-dots -------------------------------------------------
    # block 0: stage 1  f_up_l1 | xf_up_l1   (f1=x4,f1d=x13 / f2=x7,f2d=x16)
    put_x(0, "f_up_l1", [4, 13], 0)
    put_x(0, "xf_up_l1", [7, 16], 2)
    bias_x(0, "f_up_l1", 0); bias_x(0, "xf_up_l1", 2)
    wx[0 * PW + CONST, CONST] = 1.0
    # block 1: stage 3 x-part  k_up_l1 | xk_up_l1  (k1=x3,k1d=x12 / k2=x6,k2d=x15)
    put_x(1, "k_up_l1", [3, 12], 0, in_subset=[0, 1])
    put_x(1, "xk_up_l1", [6, 15], 4, in_subset=[0, 1])
    bias_x(1, "k_up_l1", 0); bias_x(1, "xk_up_l1", 4)
    wx[1 * PW + CONST, CONST] = 1.0
    # block 2: stage 5 x-part  h_up_l1 | xh_up_l1  (h1=x2,h1d=x11 / h2=x5,h2d=x14)
    put_x(2, "h_up_l1", [2, 11], 0, in_subset=[0, 1])
    put_x(2, "xh_up_l1", [5, 14], 6, in_subset=[0, 1])
    bias_x(2, "h_up_l1", 0); bias_x(2, "xh_up_l1", 6)
    wx[2 * PW + CONST, CONST] = 1.0
    # block 3: stage 7 x-part  m_down_l1 (m_obs = x[0,1,8,9,10])
    put_x(3, "m_down_l1", [0, 1, 8, 9, 10], 0, in_subset=[0, 1, 2, 3, 4])
    bias_x(3, "m_down_l1", 0)
    wx[3 * PW + CONST, CONST] = 1.0
    # block 4: stage 14 x-part  six *_act_l1 heads (joint pos / vel columns)
    put_x(4, "h_act_l1", [2, 11], 0, in_subset=[0, 1])
    put_x(4, "f_act_l1", [4, 13], 4, in_subset=[0, 1])
    put_x(4, "k_act_l1", [3, 12], 8, in_subset=[0, 1])
    put_x(4, "xh_act_l1", [5, 14], 12, in_subset=[0, 1])
    put_x(4, "xk_act_l1", [6, 15], 16, in_subset=[0, 1])
    put_x(4, "xf_act_l1", [7, 16], 20, in_subset=[0, 1])
    bias_x(4, "h_act_l1", 0); bias_x(4, "f_act_l1", 4); bias_x(4, "k_act_l1", 8)
    bias_x(4, "xh_act_l1", 12); bias_x(4, "xk_act_l1", 16); bias_x(4, "xf_act_l1", 20)
    wx[4 * PW + CONST, CONST] = 1.0

    # ---- chain dots ------------------------------------------------------
    # c0: stage 2  f_up_l2 | xf_up_l2
    put_c(0, "f_up_l2", [0, 1], 0)
    put_c(0, "xf_up_l2", [2, 3], 2)
    bias_c(0, "f_up_l2", 0); bias_c(0, "xf_up_l2", 2)
    wc[0, CONST, CONST] = 1.0
    # c1: stage 3 a2-part  (f_up inputs, idx 2..3)
    put_c(1, "k_up_l1", [0, 1], 0, in_subset=[2, 3])
    put_c(1, "xk_up_l1", [2, 3], 4, in_subset=[2, 3])
    # c2: stage 4  k_up_l2 | xk_up_l2
    put_c(2, "k_up_l2", [0, 1, 2, 3], 0)
    put_c(2, "xk_up_l2", [4, 5, 6, 7], 4)
    bias_c(2, "k_up_l2", 0); bias_c(2, "xk_up_l2", 4)
    wc[2, CONST, CONST] = 1.0
    # c3: stage 5 a4-part  (k_up inputs, idx 2..5)
    put_c(3, "h_up_l1", [0, 1, 2, 3], 0, in_subset=[2, 3, 4, 5])
    put_c(3, "xh_up_l1", [4, 5, 6, 7], 6, in_subset=[2, 3, 4, 5])
    # c4: stage 6  h_up_l2 | xh_up_l2
    put_c(4, "h_up_l2", list(range(0, 6)), 0)
    put_c(4, "xh_up_l2", list(range(6, 12)), 6)
    bias_c(4, "h_up_l2", 0); bias_c(4, "xh_up_l2", 6)
    wc[4, CONST, CONST] = 1.0
    # c5: stage 7 a6-part  (h_up_1 / h_up_2, input idx 5..16)
    put_c(5, "m_down_l1", list(range(0, 12)), 0, in_subset=list(range(5, 17)))
    # c6: stage 8  m_down_l2
    put_c(6, "m_down_l2", list(range(16)), 0)
    bias_c(6, "m_down_l2", 0)
    wc[6, CONST, CONST] = 1.0
    # c7: stage 9  m_down_l2_1 | m_down_l2_2
    put_c(7, "m_down_l2_1", list(range(16)), 0)
    put_c(7, "m_down_l2_2", list(range(16)), 6)
    bias_c(7, "m_down_l2_1", 0); bias_c(7, "m_down_l2_2", 6)
    wc[7, CONST, CONST] = 1.0
    # c8: stage 10  h_down_l1 | xh_down_l1  (tanh; const row becomes tanh(1))
    put_c(8, "h_down_l1", list(range(0, 6)), 0)
    put_c(8, "xh_down_l1", list(range(6, 12)), 6)
    bias_c(8, "h_down_l1", 0); bias_c(8, "xh_down_l1", 6)
    wc[8, CONST, CONST] = 1.0
    # c9: stage 11  h_down_l2 | xh_down_l2  (input constant = tanh(1))
    put_c(9, "h_down_l2", list(range(0, 6)), 0)
    put_c(9, "xh_down_l2", list(range(6, 12)), 6)
    bias_c(9, "h_down_l2", 0, div=C); bias_c(9, "xh_down_l2", 6, div=C)
    wc[9, CONST, CONST] = 1.0 / C
    # c10: stage 12  k_down_l1 | xk_down_l1  (tanh)
    put_c(10, "k_down_l1", list(range(0, 6)), 0)
    put_c(10, "xk_down_l1", list(range(6, 12)), 4)
    bias_c(10, "k_down_l1", 0); bias_c(10, "xk_down_l1", 4)
    wc[10, CONST, CONST] = 1.0
    # c11: stage 13  k_down_l2 | xk_down_l2  (input constant = tanh(1))
    put_c(11, "k_down_l2", [0, 1, 2, 3], 0)
    put_c(11, "xk_down_l2", [4, 5, 6, 7], 4)
    bias_c(11, "k_down_l2", 0, div=C); bias_c(11, "xk_down_l2", 4, div=C)
    # c12: stage 14 a9-part  (m_down inputs, idx 2..7)
    put_c(12, "h_act_l1", list(range(0, 6)), 0, in_subset=list(range(2, 8)))
    put_c(12, "xh_act_l1", list(range(6, 12)), 12, in_subset=list(range(2, 8)))
    # c13: stage 14 a11-part (h_down inputs, idx 2..7)
    put_c(13, "k_act_l1", list(range(0, 6)), 8, in_subset=list(range(2, 8)))
    put_c(13, "xk_act_l1", list(range(6, 12)), 16, in_subset=list(range(2, 8)))
    # c14: stage 14 a13-part (k_down inputs, idx 2..5)
    put_c(14, "f_act_l1", list(range(0, 4)), 4, in_subset=list(range(2, 6)))
    put_c(14, "xf_act_l1", list(range(4, 8)), 20, in_subset=list(range(2, 6)))
    # c15: stage 15  six *_act_l2 heads -> output rows 0..5
    put_c(15, "h_act_l2", [0, 1, 2, 3], 0)
    put_c(15, "f_act_l2", [4, 5, 6, 7], 1)
    put_c(15, "k_act_l2", [8, 9, 10, 11], 2)
    put_c(15, "xh_act_l2", [12, 13, 14, 15], 3)
    put_c(15, "xk_act_l2", [16, 17, 18, 19], 4)
    put_c(15, "xf_act_l2", [20, 21, 22, 23], 5)
    bias_c(15, "h_act_l2", 0); bias_c(15, "f_act_l2", 1); bias_c(15, "k_act_l2", 2)
    bias_c(15, "xh_act_l2", 3); bias_c(15, "xk_act_l2", 4); bias_c(15, "xf_act_l2", 5)

    return jnp.asarray(wx), jnp.asarray(wc)


# --------------------------------------------------------------------------
# Wrapper.
# --------------------------------------------------------------------------
@jax.jit
def pnet_forward(x, wx, wc):
    x = x.astype(jnp.float32)
    B = x.shape[0]

    # Balanced batch tiles on the lane axis (multiples of 128).
    nt = max(1, _cdiv(B, BT_MAX))
    if B > 256 and nt < 2:
        nt = 2                      # >= 2 grid steps so v7x's 2nd TC gets work
    bt = _round_up(_cdiv(B, nt), 128)
    Bp = nt * bt

    # Feature-major input slab: [32, Bp]; rows 0..16 = x.T, row 31 = 1.0 (bias lane).
    xt = jnp.zeros((PW, Bp), jnp.float32)
    xt = xt.at[:NX, :B].set(x.T)
    xt = xt.at[CONST, :].set(1.0)

    out = pl.pallas_call(
        pnet_kernel,
        out_shape=jax.ShapeDtypeStruct((8, Bp), jnp.float32),
        grid_spec=pl.GridSpec(
            grid=(nt,),
            in_specs=[
                pl.BlockSpec((PW, bt), lambda i: (0, i)),
                pl.BlockSpec((NXDOT * PW, PW), lambda i: (0, 0)),   # resident
                pl.BlockSpec((NC, PW, PW), lambda i: (0, 0, 0)),    # resident
            ],
            out_specs=pl.BlockSpec((8, bt), lambda i: (0, i)),
        ),
        compiler_params=pltpu.CompilerParams(
            dimension_semantics=("parallel",),
            vmem_limit_bytes=32 * 1024 * 1024),
    )(xt, wx, wc)

    return out[:6, :B].T            # -> [B, 6] in the original column order


# --------------------------------------------------------------------------
# Pure-JAX reference (layer-by-layer, mirrors the PyTorch forward).
# --------------------------------------------------------------------------
def pnet_reference(x, params):
    def lin(v, n):
        w, b = params[n]
        return v @ w.T + b
    relu = lambda v: jnp.maximum(v, 0.0)
    cat = lambda vs: jnp.concatenate(vs, axis=1)
    h1, k1, f1 = x[:, 2:3], x[:, 3:4], x[:, 4:5]
    h2, k2, f2 = x[:, 5:6], x[:, 6:7], x[:, 7:8]
    h1d, k1d, f1d = x[:, 11:12], x[:, 12:13], x[:, 13:14]
    h2d, k2d, f2d = x[:, 14:15], x[:, 15:16], x[:, 16:17]
    m_obs = cat([x[:, 0:2], x[:, 8:11]])
    f_up_1 = relu(lin(relu(lin(cat([f1, f1d]), "f_up_l1")), "f_up_l2"))
    k_up_1 = relu(lin(relu(lin(cat([k1, k1d, f_up_1]), "k_up_l1")), "k_up_l2"))
    h_up_1 = relu(lin(relu(lin(cat([h1, h1d, k_up_1]), "h_up_l1")), "h_up_l2"))
    f_up_2 = relu(lin(relu(lin(cat([f2, f2d]), "xf_up_l1")), "xf_up_l2"))
    k_up_2 = relu(lin(relu(lin(cat([k2, k2d, f_up_2]), "xk_up_l1")), "xk_up_l2"))
    h_up_2 = relu(lin(relu(lin(cat([h2, h2d, k_up_2]), "xh_up_l1")), "xh_up_l2"))
    m_down = relu(lin(relu(lin(cat([m_obs, h_up_1, h_up_2]), "m_down_l1")), "m_down_l2"))
    m_down_1 = relu(lin(m_down, "m_down_l2_1"))
    m_down_2 = relu(lin(m_down, "m_down_l2_2"))
    h_down_1 = relu(lin(jnp.tanh(lin(m_down_1, "h_down_l1")), "h_down_l2"))
    k_down_1 = relu(lin(jnp.tanh(lin(h_down_1, "k_down_l1")), "k_down_l2"))
    h_down_2 = relu(lin(jnp.tanh(lin(m_down_2, "xh_down_l1")), "xh_down_l2"))
    k_down_2 = relu(lin(jnp.tanh(lin(h_down_2, "xk_down_l1")), "xk_down_l2"))
    h_act_1 = lin(relu(lin(cat([h1, h1d, m_down_1]), "h_act_l1")), "h_act_l2")
    k_act_1 = lin(relu(lin(cat([k1, k1d, h_down_1]), "k_act_l1")), "k_act_l2")
    f_act_1 = lin(relu(lin(cat([f1, f1d, k_down_1]), "f_act_l1")), "f_act_l2")
    h_act_2 = lin(relu(lin(cat([h2, h2d, m_down_2]), "xh_act_l1")), "xh_act_l2")
    k_act_2 = lin(relu(lin(cat([k2, k2d, h_down_2]), "xk_act_l1")), "xk_act_l2")
    f_act_2 = lin(relu(lin(cat([f2, f2d, k_down_2]), "xf_act_l1")), "xf_act_l2")
    return cat([h_act_1, f_act_1, k_act_1, h_act_2, k_act_2, f_act_2])


if __name__ == "__main__":
    key = jax.random.PRNGKey(0)
    kx, kp = jax.random.split(key)
    B = 64
    x = jax.random.normal(kx, (B, NX), dtype=jnp.float32)

    params = init_params(kp)
    wx, wc = pack_params(params)

    out = pnet_forward(x, wx, wc)
    out = jax.block_until_ready(out)

    ref = pnet_reference(x, params)
    assert out.shape == (B, 6)
    assert jnp.allclose(out, ref, atol=1e-4, rtol=1e-4), \
        "Pallas output mismatch vs JAX reference"

    print("KERNEL_OK")
</pallas_src>

<mosaic_0001>
module attributes {stable_mosaic.version = 11 : i64} {
  func.func @pnet_kernel(%arg0: i32, %arg1: memref<32x128xf32, #tpu.memory_space<vmem>>, %arg2: memref<160x32xf32, #tpu.memory_space<vmem>>, %arg3: memref<16x32x32xf32, #tpu.memory_space<vmem>>, %arg4: memref<8x128xf32, #tpu.memory_space<vmem>>) attributes {dimension_semantics = [#tpu.dimension_semantics<parallel>], iteration_bounds = array<i64: 1>, scalar_prefetch = 0 : i64, scratch_operands = 0 : i64, tpu.core_type = #tpu.core_type<tc>, window_params = [{transform_indices = @transform_0, window_bounds = array<i64: 32, 128>}, {pipeline_mode = #tpu.pipeline_mode<synchronous>, transform_indices = @transform_1, window_bounds = array<i64: 160, 32>}, {pipeline_mode = #tpu.pipeline_mode<synchronous>, transform_indices = @transform_2, window_bounds = array<i64: 16, 32, 32>}, {transform_indices = @transform_3, window_bounds = array<i64: 8, 128>}]} {
    %c0 = arith.constant 0 : index
    %c0_0 = arith.constant 0 : index
    %0 = vector.load %arg1[%c0, %c0_0] : memref<32x128xf32, #tpu.memory_space<vmem>>, vector<32x128xf32>
    %c0_1 = arith.constant 0 : index
    %c0_2 = arith.constant 0 : index
    %1 = vector.load %arg2[%c0_1, %c0_2] : memref<160x32xf32, #tpu.memory_space<vmem>>, vector<160x32xf32>
    %cst = arith.constant dense<0.000000e+00> : vector<160x128xf32>
    %2 = tpu.matmul %1, %0, %cst {dimension_numbers = #tpu.dot_dimension_numbers<[1], [0], [0], [1], [0, 0, 1, 1], [], []>} : vector<160x32xf32>, vector<32x128xf32>, vector<160x128xf32> -> vector<160x128xf32>
    %3 = vector.extract_strided_slice %2 {offsets = [0, 0], sizes = [32, 128], strides = [1, 1]} : vector<160x128xf32> to vector<32x128xf32>
    %4 = vector.extract_strided_slice %2 {offsets = [32, 0], sizes = [32, 128], strides = [1, 1]} : vector<160x128xf32> to vector<32x128xf32>
    %5 = vector.extract_strided_slice %2 {offsets = [64, 0], sizes = [32, 128], strides = [1, 1]} : vector<160x128xf32> to vector<32x128xf32>
    %6 = vector.extract_strided_slice %2 {offsets = [96, 0], sizes = [32, 128], strides = [1, 1]} : vector<160x128xf32> to vector<32x128xf32>
    %7 = vector.extract_strided_slice %2 {offsets = [128, 0], sizes = [32, 128], strides = [1, 1]} : vector<160x128xf32> to vector<32x128xf32>
    %cst_3 = arith.constant 0.000000e+00 : f32
    %8 = vector.broadcast %cst_3 : f32 to vector<32x128xf32>
    %9 = arith.maximumf %3, %8 : vector<32x128xf32>
    %c0_4 = arith.constant 0 : index
    %c0_5 = arith.constant 0 : index
    %c0_6 = arith.constant 0 : index
    %10 = vector.load %arg3[%c0_4, %c0_5, %c0_6] : memref<16x32x32xf32, #tpu.memory_space<vmem>>, vector<1x32x32xf32>
    %11 = vector.shape_cast %10 : vector<1x32x32xf32> to vector<32x32xf32>
    %cst_7 = arith.constant dense<0.000000e+00> : vector<32x128xf32>
    %12 = tpu.matmul %11, %9, %cst_7 {dimension_numbers = #tpu.dot_dimension_numbers<[1], [0], [0], [1], [0, 0, 1, 1], [], []>} : vector<32x32xf32>, vector<32x128xf32>, vector<32x128xf32> -> vector<32x128xf32>
    %cst_8 = arith.constant 0.000000e+00 : f32
    %13 = vector.broadcast %cst_8 : f32 to vector<32x128xf32>
    %14 = arith.maximumf %12, %13 : vector<32x128xf32>
    %c1 = arith.constant 1 : index
    %c0_9 = arith.constant 0 : index
    %c0_10 = arith.constant 0 : index
    %15 = vector.load %arg3[%c1, %c0_9, %c0_10] : memref<16x32x32xf32, #tpu.memory_space<vmem>>, vector<1x32x32xf32>
    %16 = vector.shape_cast %15 : vector<1x32x32xf32> to vector<32x32xf32>
    %cst_11 = arith.constant dense<0.000000e+00> : vector<32x128xf32>
    %17 = tpu.matmul %16, %14, %cst_11 {dimension_numbers = #tpu.dot_dimension_numbers<[1], [0], [0], [1], [0, 0, 1, 1], [], []>} : vector<32x32xf32>, vector<32x128xf32>, vector<32x128xf32> -> vector<32x128xf32>
    %18 = arith.addf %4, %17 : vector<32x128xf32>
    %cst_12 = arith.constant 0.000000e+00 : f32
    %19 = vector.broadcast %cst_12 : f32 to vector<32x128xf32>
    %20 = arith.maximumf %18, %19 : vector<32x128xf32>
    %c2 = arith.constant 2 : index
    %c0_13 = arith.constant 0 : index
    %c0_14 = arith.constant 0 : index
    %21 = vector.load %arg3[%c2, %c0_13, %c0_14] : memref<16x32x32xf32, #tpu.memory_space<vmem>>, vector<1x32x32xf32>
    %22 = vector.shape_cast %21 : vector<1x32x32xf32> to vector<32x32xf32>
    %cst_15 = arith.constant dense<0.000000e+00> : vector<32x128xf32>
    %23 = tpu.matmul %22, %20, %cst_15 {dimension_numbers = #tpu.dot_dimension_numbers<[1], [0], [0], [1], [0, 0, 1, 1], [], []>} : vector<32x32xf32>, vector<32x128xf32>, vector<32x128xf32> -> vector<32x128xf32>
    %cst_16 = arith.constant 0.000000e+00 : f32
    %24 = vector.broadcast %cst_16 : f32 to vector<32x128xf32>
    %25 = arith.maximumf %23, %24 : vector<32x128xf32>
    %c3 = arith.constant 3 : index
    %c0_17 = arith.constant 0 : index
    %c0_18 = arith.constant 0 : index
    %26 = vector.load %arg3[%c3, %c0_17, %c0_18] : memref<16x32x32xf32, #tpu.memory_space<vmem>>, vector<1x32x32xf32>
    %27 = vector.shape_cast %26 : vector<1x32x32xf32> to vector<32x32xf32>
    %cst_19 = arith.constant dense<0.000000e+00> : vector<32x128xf32>
    %28 = tpu.matmul %27, %25, %cst_19 {dimension_numbers = #tpu.dot_dimension_numbers<[1], [0], [0], [1], [0, 0, 1, 1], [], []>} : vector<32x32xf32>, vector<32x128xf32>, vector<32x128xf32> -> vector<32x128xf32>
    %29 = arith.addf %5, %28 : vector<32x128xf32>
    %cst_20 = arith.constant 0.000000e+00 : f32
    %30 = vector.broadcast %cst_20 : f32 to vector<32x128xf32>
    %31 = arith.maximumf %29, %30 : vector<32x128xf32>
    %c4 = arith.constant 4 : index
    %c0_21 = arith.constant 0 : index
    %c0_22 = arith.constant 0 : index
    %32 = vector.load %arg3[%c4, %c0_21, %c0_22] : memref<16x32x32xf32, #tpu.memory_space<vmem>>, vector<1x32x32xf32>
    %33 = vector.shape_cast %32 : vector<1x32x32xf32> to vector<32x32xf32>
    %cst_23 = arith.constant dense<0.000000e+00> : vector<32x128xf32>
    %34 = tpu.matmul %33, %31, %cst_23 {dimension_numbers = #tpu.dot_dimension_numbers<[1], [0], [0], [1], [0, 0, 1, 1], [], []>} : vector<32x32xf32>, vector<32x128xf32>, vector<32x128xf32> -> vector<32x128xf32>
    %cst_24 = arith.constant 0.000000e+00 : f32
    %35 = vector.broadcast %cst_24 : f32 to vector<32x128xf32>
    %36 = arith.maximumf %34, %35 : vector<32x128xf32>
    %c5 = arith.constant 5 : index
    %c0_25 = arith.constant 0 : index
    %c0_26 = arith.constant 0 : index
    %37 = vector.load %arg3[%c5, %c0_25, %c0_26] : memref<16x32x32xf32, #tpu.memory_space<vmem>>, vector<1x32x32xf32>
    %38 = vector.shape_cast %37 : vector<1x32x32xf32> to vector<32x32xf32>
    %cst_27 = arith.constant dense<0.000000e+00> : vector<32x128xf32>
    %39 = tpu.matmul %38, %36, %cst_27 {dimension_numbers = #tpu.dot_dimension_numbers<[1], [0], [0], [1], [0, 0, 1, 1], [], []>} : vector<32x32xf32>, vector<32x128xf32>, vector<32x128xf32> -> vector<32x128xf32>
    %40 = arith.addf %6, %39 : vector<32x128xf32>
    %cst_28 = arith.constant 0.000000e+00 : f32
    %41 = vector.broadcast %cst_28 : f32 to vector<32x128xf32>
    %42 = arith.maximumf %40, %41 : vector<32x128xf32>
    %c6 = arith.constant 6 : index
    %c0_29 = arith.constant 0 : index
    %c0_30 = arith.constant 0 : index
    %43 = vector.load %arg3[%c6, %c0_29, %c0_30] : memref<16x32x32xf32, #tpu.memory_space<vmem>>, vector<1x32x32xf32>
    %44 = vector.shape_cast %43 : vector<1x32x32xf32> to vector<32x32xf32>
    %cst_31 = arith.constant dense<0.000000e+00> : vector<32x128xf32>
    %45 = tpu.matmul %44, %42, %cst_31 {dimension_numbers = #tpu.dot_dimension_numbers<[1], [0], [0], [1], [0, 0, 1, 1], [], []>} : vector<32x32xf32>, vector<32x128xf32>, vector<32x128xf32> -> vector<32x128xf32>
    %cst_32 = arith.constant 0.000000e+00 : f32
    %46 = vector.broadcast %cst_32 : f32 to vector<32x128xf32>
    %47 = arith.maximumf %45, %46 : vector<32x128xf32>
    %c7 = arith.constant 7 : index
    %c0_33 = arith.constant 0 : index
    %c0_34 = arith.constant 0 : index
    %48 = vector.load %arg3[%c7, %c0_33, %c0_34] : memref<16x32x32xf32, #tpu.memory_space<vmem>>, vector<1x32x32xf32>
    %49 = vector.shape_cast %48 : vector<1x32x32xf32> to vector<32x32xf32>
    %cst_35 = arith.constant dense<0.000000e+00> : vector<32x128xf32>
    %50 = tpu.matmul %49, %47, %cst_35 {dimension_numbers = #tpu.dot_dimension_numbers<[1], [0], [0], [1], [0, 0, 1, 1], [], []>} : vector<32x32xf32>, vector<32x128xf32>, vector<32x128xf32> -> vector<32x128xf32>
    %cst_36 = arith.constant 0.000000e+00 : f32
    %51 = vector.broadcast %cst_36 : f32 to vector<32x128xf32>
    %52 = arith.maximumf %50, %51 : vector<32x128xf32>
    %c8 = arith.constant 8 : index
    %c0_37 = arith.constant 0 : index
    %c0_38 = arith.constant 0 : index
    %53 = vector.load %arg3[%c8, %c0_37, %c0_38] : memref<16x32x32xf32, #tpu.memory_space<vmem>>, vector<1x32x32xf32>
    %54 = vector.shape_cast %53 : vector<1x32x32xf32> to vector<32x32xf32>
    %cst_39 = arith.constant dense<0.000000e+00> : vector<32x128xf32>
    %55 = tpu.matmul %54, %52, %cst_39 {dimension_numbers = #tpu.dot_dimension_numbers<[1], [0], [0], [1], [0, 0, 1, 1], [], []>} : vector<32x32xf32>, vector<32x128xf32>, vector<32x128xf32> -> vector<32x128xf32>
    %56 = math.tanh %55 : vector<32x128xf32>
    %c9 = arith.constant 9 : index
    %c0_40 = arith.constant 0 : index
    %c0_41 = arith.constant 0 : index
    %57 = vector.load %arg3[%c9, %c0_40, %c0_41] : memref<16x32x32xf32, #tpu.memory_space<vmem>>, vector<1x32x32xf32>
    %58 = vector.shape_cast %57 : vector<1x32x32xf32> to vector<32x32xf32>
    %cst_42 = arith.constant dense<0.000000e+00> : vector<32x128xf32>
    %59 = tpu.matmul %58, %56, %cst_42 {dimension_numbers = #tpu.dot_dimension_numbers<[1], [0], [0], [1], [0, 0, 1, 1], [], []>} : vector<32x32xf32>, vector<32x128xf32>, vector<32x128xf32> -> vector<32x128xf32>
    %cst_43 = arith.constant 0.000000e+00 : f32
    %60 = vector.broadcast %cst_43 : f32 to vector<32x128xf32>
    %61 = arith.maximumf %59, %60 : vector<32x128xf32>
    %c10 = arith.constant 10 : index
    %c0_44 = arith.constant 0 : index
    %c0_45 = arith.constant 0 : index
    %62 = vector.load %arg3[%c10, %c0_44, %c0_45] : memref<16x32x32xf32, #tpu.memory_space<vmem>>, vector<1x32x32xf32>
    %63 = vector.shape_cast %62 : vector<1x32x32xf32> to vector<32x32xf32>
    %cst_46 = arith.constant dense<0.000000e+00> : vector<32x128xf32>
    %64 = tpu.matmul %63, %61, %cst_46 {dimension_numbers = #tpu.dot_dimension_numbers<[1], [0], [0], [1], [0, 0, 1, 1], [], []>} : vector<32x32xf32>, vector<32x128xf32>, vector<32x128xf32> -> vector<32x128xf32>
    %65 = math.tanh %64 : vector<32x128xf32>
    %c11 = arith.constant 11 : index
    %c0_47 = arith.constant 0 : index
    %c0_48 = arith.constant 0 : index
    %66 = vector.load %arg3[%c11, %c0_47, %c0_48] : memref<16x32x32xf32, #tpu.memory_space<vmem>>, vector<1x32x32xf32>
    %67 = vector.shape_cast %66 : vector<1x32x32xf32> to vector<32x32xf32>
    %cst_49 = arith.constant dense<0.000000e+00> : vector<32x128xf32>
    %68 = tpu.matmul %67, %65, %cst_49 {dimension_numbers = #tpu.dot_dimension_numbers<[1], [0], [0], [1], [0, 0, 1, 1], [], []>} : vector<32x32xf32>, vector<32x128xf32>, vector<32x128xf32> -> vector<32x128xf32>
    %cst_50 = arith.constant 0.000000e+00 : f32
    %69 = vector.broadcast %cst_50 : f32 to vector<32x128xf32>
    %70 = arith.maximumf %68, %69 : vector<32x128xf32>
    %c12 = arith.constant 12 : index
    %c0_51 = arith.constant 0 : index
    %c0_52 = arith.constant 0 : index
    %71 = vector.load %arg3[%c12, %c0_51, %c0_52] : memref<16x32x32xf32, #tpu.memory_space<vmem>>, vector<1x32x32xf32>
    %72 = vector.shape_cast %71 : vector<1x32x32xf32> to vector<32x32xf32>
    %cst_53 = arith.constant dense<0.000000e+00> : vector<32x128xf32>
    %73 = tpu.matmul %72, %52, %cst_53 {dimension_numbers = #tpu.dot_dimension_numbers<[1], [0], [0], [1], [0, 0, 1, 1], [], []>} : vector<32x32xf32>, vector<32x128xf32>, vector<32x128xf32> -> vector<32x128xf32>
    %74 = arith.addf %7, %73 : vector<32x128xf32>
    %c13 = arith.constant 13 : index
    %c0_54 = arith.constant 0 : index
    %c0_55 = arith.constant 0 : index
    %75 = vector.load %arg3[%c13, %c0_54, %c0_55] : memref<16x32x32xf32, #tpu.memory_space<vmem>>, vector<1x32x32xf32>
    %76 = vector.shape_cast %75 : vector<1x32x32xf32> to vector<32x32xf32>
    %cst_56 = arith.constant dense<0.000000e+00> : vector<32x128xf32>
    %77 = tpu.matmul %76, %61, %cst_56 {dimension_numbers = #tpu.dot_dimension_numbers<[1], [0], [0], [1], [0, 0, 1, 1], [], []>} : vector<32x32xf32>, vector<32x128xf32>, vector<32x128xf32> -> vector<32x128xf32>
    %78 = arith.addf %74, %77 : vector<32x128xf32>
    %c14 = arith.constant 14 : index
    %c0_57 = arith.constant 0 : index
    %c0_58 = arith.constant 0 : index
    %79 = vector.load %arg3[%c14, %c0_57, %c0_58] : memref<16x32x32xf32, #tpu.memory_space<vmem>>, vector<1x32x32xf32>
    %80 = vector.shape_cast %79 : vector<1x32x32xf32> to vector<32x32xf32>
    %cst_59 = arith.constant dense<0.000000e+00> : vector<32x128xf32>
    %81 = tpu.matmul %80, %70, %cst_59 {dimension_numbers = #tpu.dot_dimension_numbers<[1], [0], [0], [1], [0, 0, 1, 1], [], []>} : vector<32x32xf32>, vector<32x128xf32>, vector<32x128xf32> -> vector<32x128xf32>
    %82 = arith.addf %78, %81 : vector<32x128xf32>
    %cst_60 = arith.constant 0.000000e+00 : f32
    %83 = vector.broadcast %cst_60 : f32 to vector<32x128xf32>
    %84 = arith.maximumf %82, %83 : vector<32x128xf32>
    %c15 = arith.constant 15 : index
    %c0_61 = arith.constant 0 : index
    %c0_62 = arith.constant 0 : index
    %85 = vector.load %arg3[%c15, %c0_61, %c0_62] : memref<16x32x32xf32, #tpu.memory_space<vmem>>, vector<1x32x32xf32>
    %86 = vector.shape_cast %85 : vector<1x32x32xf32> to vector<32x32xf32>
    %cst_63 = arith.constant dense<0.000000e+00> : vector<32x128xf32>
    %87 = tpu.matmul %86, %84, %cst_63 {dimension_numbers = #tpu.dot_dimension_numbers<[1], [0], [0], [1], [0, 0, 1, 1], [], []>} : vector<32x32xf32>, vector<32x128xf32>, vector<32x128xf32> -> vector<32x128xf32>
    %88 = vector.extract_strided_slice %87 {offsets = [0, 0], sizes = [8, 128], strides = [1, 1]} : vector<32x128xf32> to vector<8x128xf32>
    %c0_64 = arith.constant 0 : index
    %c0_65 = arith.constant 0 : index
    %89 = vector.load %arg4[%c0_64, %c0_65] : memref<8x128xf32, #tpu.memory_space<vmem>>, vector<8x128xf32>
    tpu.vector_store %arg4[%c0_64, %c0_65], %88 {strides = array<i32>} : memref<8x128xf32, #tpu.memory_space<vmem>>, vector<8x128xf32>,
    return
  }
  func.func @transform_0(%arg0: i32) -> (i32, i32) {
    %c0_i32 = arith.constant 0 : i32
    %c0_i32_0 = arith.constant 0 : i32
    return %c0_i32, %arg0 : i32, i32
  }
  func.func @transform_1(%arg0: i32) -> (i32, i32) {
    %c0_i32 = arith.constant 0 : i32
    %c0_i32_0 = arith.constant 0 : i32
    %c0_i32_1 = arith.constant 0 : i32
    return %c0_i32, %c0_i32_0 : i32, i32
  }
  func.func @transform_2(%arg0: i32) -> (i32, i32, i32) {
    %c0_i32 = arith.constant 0 : i32
    %c0_i32_0 = arith.constant 0 : i32
    %c0_i32_1 = arith.constant 0 : i32
    %c0_i32_2 = arith.constant 0 : i32
    return %c0_i32, %c0_i32_0, %c0_i32_1 : i32, i32, i32
  }
  func.func @transform_3(%arg0: i32) -> (i32, i32) {
    %c0_i32 = arith.constant 0 : i32
    %c0_i32_0 = arith.constant 0 : i32
    return %c0_i32, %arg0 : i32, i32
  }
}

</mosaic_0001>

<llo_original>
// kernel: pnet_forward.1
$region0: #{pnet_forward.1}
  #allocation0 [shape = 'u32[]', space=smem, size = 0x4, offset = 0x4, fixed_abs, tag = 'smem constant byte address 0x4 - core index']
  #allocation1 [shape = 'u32[72,128]{1,0:T(1,128)}', space=vmem, size = 0x9000, scoped, tag = 'internal scratch']
  %s0 = inlined_call_operand.vmem [shape: f32[32,128], index: 0, kind: input, shape index: {}]
  %s1 = inlined_call_operand.vmem [shape: f32[160,32], index: 1, kind: input, shape index: {}]
  %s2 = inlined_call_operand.hbm [shape: f32[16,32,32], index: 2, kind: input, shape index: {}]
  %s3 = inlined_call_operand.vmem [shape: f32[8,128], index: 3, kind: output, shape index: {}]
  %s4 = sld [smem:[#allocation0]]
  $region26: #{pnet_forward.1} parent=0
    _
  %s6 = ssub.s32 1, %s4
  %s7 = scalar_select 0, %s6, %s4
  $region1: #{pnet_forward.1} parent=0
    #allocation2 [shape = 'u8[262144]{0}', space=vmem, size = 0x40000, scoped, tag = 'input window, operand 2, single buffered']
    #allocation3 [shape = 's32[1]{0}', space=sflag, size = 0x4, scoped, tag = 'scoped memory for pnet_forward.1']
    %8 = vsyncpa [#allocation3], 0
    // Predicated region
    $region2: #{pnet_forward.1} parent=1 // pred_check
      _
    $region3: #{pnet_forward.1} parent=1 // pred_check_branch
      %10 = sbr.rel (0) target = $region5
    $region4: #{pnet_forward.1} parent=1 // pred_region
      _
    $region5: #{pnet_forward.1} parent=1 // pred_fallthru
      _
    // Predicated region
    $region6: #{pnet_forward.1} parent=1 // pred_check
      _
    $region7: #{pnet_forward.1} parent=1 // pred_check_branch
      %12 = sbr.rel (0) target = $region9
    $region8: #{pnet_forward.1} parent=1 // pred_region
      _
    $region9: #{pnet_forward.1} parent=1 // pred_fallthru
      _
    // Predicated region
    $region10: #{pnet_forward.1} parent=1 // pred_check
      _
    $region11: #{pnet_forward.1} parent=1 // pred_check_branch
      %14 = sbr.rel (0) target = $region13
    $region12: #{pnet_forward.1} parent=1 // pred_region
      %16 = vsyncadd [#allocation3], 0
      %s17 = sshll.u32 %s2, 4
      %s18 = int_to_ptr.hbm [resolvable:$true] %s17
      %s19 = sshll.u32 [#allocation2], 4
      %s20 = int_to_ptr.vmem [resolvable:$true] %s19
      %25 = dma.hbm_to_vmem [thread:$0]  %s18, 8192, %s20, [#allocation3], 128, 128, 8
    $region13: #{pnet_forward.1} parent=1 // pred_fallthru
      _
    // Predicated region
    $region14: #{pnet_forward.1} parent=1 // pred_check
      _
    $region15: #{pnet_forward.1} parent=1 // pred_check_branch
      %27 = sbr.rel (0) target = $region17
    $region16: #{pnet_forward.1} parent=1 // pred_region
      %29 = dma.done [#allocation3], 8192
    $region17: #{pnet_forward.1} parent=1 // pred_fallthru
      _
    %v30 = vld [vmem:[%s0] sm:$0xff]
    %v31 = vld [vmem:[%s0 + $0x8] sm:$0xff]
    %v32 = vld [vmem:[%s0 + $0x10] sm:$0xff]
    %v33 = vld [vmem:[%s0 + $0x18] sm:$0xff]
    %v34 = vld [vmem:[%s1] sm:$0xff]
    %v35 = vld [vmem:[%s1 + $0x8] sm:$0xff]
    %v36 = vld [vmem:[%s1 + $0x10] sm:$0xff]
    %v37 = vld [vmem:[%s1 + $0x18] sm:$0xff]
    %v38 = vld [vmem:[%s1 + $0x20] sm:$0xff]
    %v39 = vld [vmem:[%s1 + $0x28] sm:$0xff]
    %v40 = vld [vmem:[%s1 + $0x30] sm:$0xff]
    %v41 = vld [vmem:[%s1 + $0x38] sm:$0xff]
    %v42 = vld [vmem:[%s1 + $0x40] sm:$0xff]
    %v43 = vld [vmem:[%s1 + $0x48] sm:$0xff]
    %v44 = vld [vmem:[%s1 + $0x50] sm:$0xff]
    %v45 = vld [vmem:[%s1 + $0x58] sm:$0xff]
    %v46 = vld [vmem:[%s1 + $0x60] sm:$0xff]
    %v47 = vld [vmem:[%s1 + $0x68] sm:$0xff]
    %v48 = vld [vmem:[%s1 + $0x70] sm:$0xff]
    %v49 = vld [vmem:[%s1 + $0x78] sm:$0xff]
    %v50 = vld [vmem:[%s1 + $0x80] sm:$0xff]
    %v51 = vld [vmem:[%s1 + $0x88] sm:$0xff]
    %v52 = vld [vmem:[%s1 + $0x90] sm:$0xff]
    %v53 = vld [vmem:[%s1 + $0x98] sm:$0xff]
    %vm54 = vcmask 261120
    %v56 = vsel %vm54, %v34, 0
    %v59 = vsel %vm54, %v35, 0
    %v62 = vsel %vm54, %v36, 0
    %v65 = vsel %vm54, %v37, 0
    %v68 = vsel %vm54, %v38, 0
    %v71 = vsel %vm54, %v39, 0
    %v74 = vsel %vm54, %v40, 0
    %v77 = vsel %vm54, %v41, 0
    %v80 = vsel %vm54, %v42, 0
    %v83 = vsel %vm54, %v43, 0
    %v86 = vsel %vm54, %v44, 0
    %v89 = vsel %vm54, %v45, 0
    %v92 = vsel %vm54, %v46, 0
    %v95 = vsel %vm54, %v47, 0
    %v98 = vsel %vm54, %v48, 0
    %v101 = vsel %vm54, %v49, 0
    %v104 = vsel %vm54, %v50, 0
    %v107 = vsel %vm54, %v51, 0
    %v110 = vsel %vm54, %v52, 0
    %v113 = vsel %vm54, %v53, 0
    %115 = vmatpush.msra.mxu0 0.0
    %116 = vmatpush.msra.mxu0 0.0
    %117 = vmatpush.msra.mxu0 0.0
    %118 = vmatpush.msra.mxu0 0.0
    %119 = vmatpush.msra.mxu0 0.0
    %120 = vmatpush.msra.mxu0 0.0
    %121 = vmatpush.msra.mxu0 0.0
    %122 = vmatpush.msra.mxu0 0.0
    %123 = vmatpush.msra.mxu0 0.0
    %124 = vmatpush.msra.mxu0 0.0
    %125 = vmatpush.msra.mxu0 0.0
    %126 = vmatpush.msra.mxu0 0.0
    %127 = vmatpush.msra.mxu0 %v33
    %128 = vmatpush.msra.mxu0 %v32
    %129 = vmatpush.msra.mxu0 %v31
    %130 = vmatpush.msra.mxu0 %v30
    %131 = vmatmul.f32.gmra.mxu0 %v56
    %v132 = vpop.f32.mrf.mxu0
    %v133 = vadd.f32 0.0, %v132
    %134 = vmatmul.f32.gmra.mxu0 %v59
    %v135 = vpop.f32.mrf.mxu0
    %v136 = vadd.f32 0.0, %v135
    %137 = vmatmul.f32.gmra.mxu0 %v62
    %v138 = vpop.f32.mrf.mxu0
    %v139 = vadd.f32 0.0, %v138
    %140 = vmatmul.f32.gmra.mxu0 %v65
    %v141 = vpop.f32.mrf.mxu0
    %v142 = vadd.f32 0.0, %v141
    %143 = vmatmul.f32.gmra.mxu0 %v68
    %v144 = vpop.f32.mrf.mxu0
    %v145 = vadd.f32 0.0, %v144
    %146 = vmatmul.f32.gmra.mxu0 %v71
    %v147 = vpop.f32.mrf.mxu0
    %v148 = vadd.f32 0.0, %v147
    %149 = vmatmul.f32.gmra.mxu0 %v74
    %v150 = vpop.f32.mrf.mxu0
    %v151 = vadd.f32 0.0, %v150
    %152 = vmatmul.f32.gmra.mxu0 %v77
    %v153 = vpop.f32.mrf.mxu0
    %v154 = vadd.f32 0.0, %v153
    %155 = vmatmul.f32.gmra.mxu0 %v80
    %v156 = vpop.f32.mrf.mxu0
    %v157 = vadd.f32 0.0, %v156
    %158 = vmatmul.f32.gmra.mxu0 %v83
    %v159 = vpop.f32.mrf.mxu0
    %v160 = vadd.f32 0.0, %v159
    %161 = vmatmul.f32.gmra.mxu0 %v86
    %v162 = vpop.f32.mrf.mxu0
    %v163 = vadd.f32 0.0, %v162
    %164 = vmatmul.f32.gmra.mxu0 %v89
    %v165 = vpop.f32.mrf.mxu0
    %v166 = vadd.f32 0.0, %v165
    %167 = vmatmul.f32.gmra.mxu0 %v92
    %v168 = vpop.f32.mrf.mxu0
    %v169 = vadd.f32 0.0, %v168
    %170 = vmatmul.f32.gmra.mxu0 %v95
    %v171 = vpop.f32.mrf.mxu0
    %v172 = vadd.f32 0.0, %v171
    %173 = vmatmul.f32.gmra.mxu0 %v98
    %v174 = vpop.f32.mrf.mxu0
    %v175 = vadd.f32 0.0, %v174
    %176 = vmatmul.f32.gmra.mxu0 %v101
    %v177 = vpop.f32.mrf.mxu0
    %v178 = vadd.f32 0.0, %v177
    %179 = vmatmul.f32.gmra.mxu0 %v104
    %v180 = vpop.f32.mrf.mxu0
    %v181 = vadd.f32 0.0, %v180
    %182 = vmatmul.f32.gmra.mxu0 %v107
    %v183 = vpop.f32.mrf.mxu0
    %v184 = vadd.f32 0.0, %v183
    %185 = vmatmul.f32.gmra.mxu0 %v110
    %v186 = vpop.f32.mrf.mxu0
    %v187 = vadd.f32 0.0, %v186
    %188 = vmatmul.f32.gmra.mxu0 %v113
    %v189 = vpop.f32.mrf.mxu0
    %v190 = vadd.f32 0.0, %v189
    %191 = vdwg.mxu0
    %v192 = vmax.f32 %v133, 0.0
    %v193 = vmax.f32 %v136, 0.0
    %v194 = vmax.f32 %v139, 0.0
    %v195 = vmax.f32 %v142, 0.0
    %v196 = vld [vmem:[#allocation2] sm:$0xff]
    %v197 = vld [vmem:[#allocation2 + $0x8] sm:$0xff]
    %v198 = vld [vmem:[#allocation2 + $0x10] sm:$0xff]
    %v199 = vld [vmem:[#allocation2 + $0x18] sm:$0xff]
    %v201 = vsel %vm54, %v196, 0
    %v204 = vsel %vm54, %v197, 0
    %v207 = vsel %vm54, %v198, 0
    %v210 = vsel %vm54, %v199, 0
    %212 = vmatpush.msra.mxu0 0.0
    %213 = vmatpush.msra.mxu0 0.0
    %214 = vmatpush.msra.mxu0 0.0
    %215 = vmatpush.msra.mxu0 0.0
    %216 = vmatpush.msra.mxu0 0.0
    %217 = vmatpush.msra.mxu0 0.0
    %218 = vmatpush.msra.mxu0 0.0
    %219 = vmatpush.msra.mxu0 0.0
    %220 = vmatpush.msra.mxu0 0.0
    %221 = vmatpush.msra.mxu0 0.0
    %222 = vmatpush.msra.mxu0 0.0
    %223 = vmatpush.msra.mxu0 0.0
    %224 = vmatpush.msra.mxu0 %v195
    %225 = vmatpush.msra.mxu0 %v194
    %226 = vmatpush.msra.mxu0 %v193
    %227 = vmatpush.msra.mxu0 %v192
    %228 = vmatmul.f32.gmra.mxu0 %v201
    %v229 = vpop.f32.mrf.mxu0
    %v230 = vadd.f32 0.0, %v229
    %231 = vmatmul.f32.gmra.mxu0 %v204
    %v232 = vpop.f32.mrf.mxu0
    %v233 = vadd.f32 0.0, %v232
    %234 = vmatmul.f32.gmra.mxu0 %v207
    %v235 = vpop.f32.mrf.mxu0
    %v236 = vadd.f32 0.0, %v235
    %237 = vmatmul.f32.gmra.mxu0 %v210
    %v238 = vpop.f32.mrf.mxu0
    %v239 = vadd.f32 0.0, %v238
    %240 = vdwg.mxu0
    %v241 = vmax.f32 %v230, 0.0
    %v242 = vmax.f32 %v233, 0.0
    %v243 = vmax.f32 %v236, 0.0
    %v244 = vmax.f32 %v239, 0.0
    %s245 = scalar_lea.vmem [#allocation2], 32
    %v246 = vld [vmem:[%s245] sm:$0xff]
    %v247 = vld [vmem:[%s245 + $0x8] sm:$0xff]
    %v248 = vld [vmem:[%s245 + $0x10] sm:$0xff]
    %v249 = vld [vmem:[%s245 + $0x18] sm:$0xff]
    %v251 = vsel %vm54, %v246, 0
    %v254 = vsel %vm54, %v247, 0
    %v257 = vsel %vm54, %v248, 0
    %v260 = vsel %vm54, %v249, 0
    %262 = vmatpush.msra.mxu0 0.0
    %263 = vmatpush.msra.mxu0 0.0
    %264 = vmatpush.msra.mxu0 0.0
    %265 = vmatpush.msra.mxu0 0.0
    %266 = vmatpush.msra.mxu0 0.0
    %267 = vmatpush.msra.mxu0 0.0
    %268 = vmatpush.msra.mxu0 0.0
    %269 = vmatpush.msra.mxu0 0.0
    %270 = vmatpush.msra.mxu0 0.0
    %271 = vmatpush.msra.mxu0 0.0
    %272 = vmatpush.msra.mxu0 0.0
    %273 = vmatpush.msra.mxu0 0.0
    %274 = vmatpush.msra.mxu0 %v244
    %275 = vmatpush.msra.mxu0 %v243
    %276 = vmatpush.msra.mxu0 %v242
    %277 = vmatpush.msra.mxu0 %v241
    %278 = vmatmul.f32.gmra.mxu0 %v251
    %v279 = vpop.f32.mrf.mxu0
    %v280 = vadd.f32 0.0, %v279
    %281 = vmatmul.f32.gmra.mxu0 %v254
    %v282 = vpop.f32.mrf.mxu0
    %v283 = vadd.f32 0.0, %v282
    %284 = vmatmul.f32.gmra.mxu0 %v257
    %v285 = vpop.f32.mrf.mxu0
    %v286 = vadd.f32 0.0, %v285
    %287 = vmatmul.f32.gmra.mxu0 %v260
    %v288 = vpop.f32.mrf.mxu0
    %v289 = vadd.f32 0.0, %v288
    %290 = vdwg.mxu0
    %v291 = vadd.f32 %v145, %v280
    %v292 = vadd.f32 %v148, %v283
    %v293 = vadd.f32 %v151, %v286
    %v294 = vadd.f32 %v154, %v289
    %v295 = vmax.f32 %v291, 0.0
    %v296 = vmax.f32 %v292, 0.0
    %v297 = vmax.f32 %v293, 0.0
    %v298 = vmax.f32 %v294, 0.0
    %s299 = scalar_lea.vmem [#allocation2], 64
    %v300 = vld [vmem:[%s299] sm:$0xff]
    %v301 = vld [vmem:[%s299 + $0x8] sm:$0xff]
    %v302 = vld [vmem:[%s299 + $0x10] sm:$0xff]
    %v303 = vld [vmem:[%s299 + $0x18] sm:$0xff]
    %v305 = vsel %vm54, %v300, 0
    %v308 = vsel %vm54, %v301, 0
    %v311 = vsel %vm54, %v302, 0
    %v314 = vsel %vm54, %v303, 0
    %316 = vmatpush.msra.mxu0 0.0
    %317 = vmatpush.msra.mxu0 0.0
    %318 = vmatpush.msra.mxu0 0.0
    %319 = vmatpush.msra.mxu0 0.0
    %320 = vmatpush.msra.mxu0 0.0
    %321 = vmatpush.msra.mxu0 0.0
    %322 = vmatpush.msra.mxu0 0.0
    %323 = vmatpush.msra.mxu0 0.0
    %324 = vmatpush.msra.mxu0 0.0
    %325 = vmatpush.msra.mxu0 0.0
    %326 = vmatpush.msra.mxu0 0.0
    %327 = vmatpush.msra.mxu0 0.0
    %328 = vmatpush.msra.mxu0 %v298
    %329 = vmatpush.msra.mxu0 %v297
    %330 = vmatpush.msra.mxu0 %v296
    %331 = vmatpush.msra.mxu0 %v295
    %332 = vmatmul.f32.gmra.mxu0 %v305
    %v333 = vpop.f32.mrf.mxu0
    %v334 = vadd.f32 0.0, %v333
    %335 = vmatmul.f32.gmra.mxu0 %v308
    %v336 = vpop.f32.mrf.mxu0
    %v337 = vadd.f32 0.0, %v336
    %338 = vmatmul.f32.gmra.mxu0 %v311
    %v339 = vpop.f32.mrf.mxu0
    %v340 = vadd.f32 0.0, %v339
    %341 = vmatmul.f32.gmra.mxu0 %v314
    %v342 = vpop.f32.mrf.mxu0
    %v343 = vadd.f32 0.0, %v342
    %344 = vdwg.mxu0
    %v345 = vmax.f32 %v334, 0.0
    %v346 = vmax.f32 %v337, 0.0
    %v347 = vmax.f32 %v340, 0.0
    %v348 = vmax.f32 %v343, 0.0
    %s349 = scalar_lea.vmem [#allocation2], 96
    %v350 = vld [vmem:[%s349] sm:$0xff]
    %v351 = vld [vmem:[%s349 + $0x8] sm:$0xff]
    %v352 = vld [vmem:[%s349 + $0x10] sm:$0xff]
    %v353 = vld [vmem:[%s349 + $0x18] sm:$0xff]
    %v355 = vsel %vm54, %v350, 0
    %v358 = vsel %vm54, %v351, 0
    %v361 = vsel %vm54, %v352, 0
    %v364 = vsel %vm54, %v353, 0
    %366 = vmatpush.msra.mxu0 0.0
    %367 = vmatpush.msra.mxu0 0.0
    %368 = vmatpush.msra.mxu0 0.0
    %369 = vmatpush.msra.mxu0 0.0
    %370 = vmatpush.msra.mxu0 0.0
    %371 = vmatpush.msra.mxu0 0.0
    %372 = vmatpush.msra.mxu0 0.0
    %373 = vmatpush.msra.mxu0 0.0
    %374 = vmatpush.msra.mxu0 0.0
    %375 = vmatpush.msra.mxu0 0.0
    %376 = vmatpush.msra.mxu0 0.0
    %377 = vmatpush.msra.mxu0 0.0
    %378 = vmatpush.msra.mxu0 %v348
    %379 = vmatpush.msra.mxu0 %v347
    %380 = vmatpush.msra.mxu0 %v346
    %381 = vmatpush.msra.mxu0 %v345
    %382 = vmatmul.f32.gmra.mxu0 %v355
    %v383 = vpop.f32.mrf.mxu0
    %v384 = vadd.f32 0.0, %v383
    %385 = vmatmul.f32.gmra.mxu0 %v358
    %v386 = vpop.f32.mrf.mxu0
    %v387 = vadd.f32 0.0, %v386
    %388 = vmatmul.f32.gmra.mxu0 %v361
    %v389 = vpop.f32.mrf.mxu0
    %v390 = vadd.f32 0.0, %v389
    %391 = vmatmul.f32.gmra.mxu0 %v364
    %v392 = vpop.f32.mrf.mxu0
    %v393 = vadd.f32 0.0, %v392
    %394 = vdwg.mxu0
    %v395 = vadd.f32 %v157, %v384
    %v396 = vadd.f32 %v160, %v387
    %v397 = vadd.f32 %v163, %v390
    %v398 = vadd.f32 %v166, %v393
    %v399 = vmax.f32 %v395, 0.0
    %v400 = vmax.f32 %v396, 0.0
    %v401 = vmax.f32 %v397, 0.0
    %v402 = vmax.f32 %v398, 0.0
    %s403 = scalar_lea.vmem [#allocation2], 128
    %v404 = vld [vmem:[%s403] sm:$0xff]
    %v405 = vld [vmem:[%s403 + $0x8] sm:$0xff]
    %v406 = vld [vmem:[%s403 + $0x10] sm:$0xff]
    %v407 = vld [vmem:[%s403 + $0x18] sm:$0xff]
    %v409 = vsel %vm54, %v404, 0
    %v412 = vsel %vm54, %v405, 0
    %v415 = vsel %vm54, %v406, 0
    %v418 = vsel %vm54, %v407, 0
    %420 = vmatpush.msra.mxu0 0.0
    %421 = vmatpush.msra.mxu0 0.0
    %422 = vmatpush.msra.mxu0 0.0
    %423 = vmatpush.msra.mxu0 0.0
    %424 = vmatpush.msra.mxu0 0.0
    %425 = vmatpush.msra.mxu0 0.0
    %426 = vmatpush.msra.mxu0 0.0
    %427 = vmatpush.msra.mxu0 0.0
    %428 = vmatpush.msra.mxu0 0.0
    %429 = vmatpush.msra.mxu0 0.0
    %430 = vmatpush.msra.mxu0 0.0
    %431 = vmatpush.msra.mxu0 0.0
    %432 = vmatpush.msra.mxu0 %v402
    %433 = vmatpush.msra.mxu0 %v401
    %434 = vmatpush.msra.mxu0 %v400
    %435 = vmatpush.msra.mxu0 %v399
    %436 = vmatmul.f32.gmra.mxu0 %v409
    %v437 = vpop.f32.mrf.mxu0
    %v438 = vadd.f32 0.0, %v437
    %439 = vmatmul.f32.gmra.mxu0 %v412
    %v440 = vpop.f32.mrf.mxu0
    %v441 = vadd.f32 0.0, %v440
    %442 = vmatmul.f32.gmra.mxu0 %v415
    %v443 = vpop.f32.mrf.mxu0
    %v444 = vadd.f32 0.0, %v443
    %445 = vmatmul.f32.gmra.mxu0 %v418
    %v446 = vpop.f32.mrf.mxu0
    %v447 = vadd.f32 0.0, %v446
    %448 = vdwg.mxu0
    %v449 = vmax.f32 %v438, 0.0
    %v450 = vmax.f32 %v441, 0.0
    %v451 = vmax.f32 %v444, 0.0
    %v452 = vmax.f32 %v447, 0.0
    %s453 = scalar_lea.vmem [#allocation2], 160
    %v454 = vld [vmem:[%s453] sm:$0xff]
    %v455 = vld [vmem:[%s453 + $0x8] sm:$0xff]
    %v456 = vld [vmem:[%s453 + $0x10] sm:$0xff]
    %v457 = vld [vmem:[%s453 + $0x18] sm:$0xff]
    %v459 = vsel %vm54, %v454, 0
    %v462 = vsel %vm54, %v455, 0
    %v465 = vsel %vm54, %v456, 0
    %v468 = vsel %vm54, %v457, 0
    %470 = vmatpush.msra.mxu0 0.0
    %471 = vmatpush.msra.mxu0 0.0
    %472 = vmatpush.msra.mxu0 0.0
    %473 = vmatpush.msra.mxu0 0.0
    %474 = vmatpush.msra.mxu0 0.0
    %475 = vmatpush.msra.mxu0 0.0
    %476 = vmatpush.msra.mxu0 0.0
    %477 = vmatpush.msra.mxu0 0.0
    %478 = vmatpush.msra.mxu0 0.0
    %479 = vmatpush.msra.mxu0 0.0
    %480 = vmatpush.msra.mxu0 0.0
    %481 = vmatpush.msra.mxu0 0.0
    %482 = vmatpush.msra.mxu0 %v452
    %483 = vmatpush.msra.mxu0 %v451
    %484 = vmatpush.msra.mxu0 %v450
    %485 = vmatpush.msra.mxu0 %v449
    %486 = vmatmul.f32.gmra.mxu0 %v459
    %v487 = vpop.f32.mrf.mxu0
    %v488 = vadd.f32 0.0, %v487
    %489 = vmatmul.f32.gmra.mxu0 %v462
    %v490 = vpop.f32.mrf.mxu0
    %v491 = vadd.f32 0.0, %v490
    %492 = vmatmul.f32.gmra.mxu0 %v465
    %v493 = vpop.f32.mrf.mxu0
    %v494 = vadd.f32 0.0, %v493
    %495 = vmatmul.f32.gmra.mxu0 %v468
    %v496 = vpop.f32.mrf.mxu0
    %v497 = vadd.f32 0.0, %v496
    %498 = vdwg.mxu0
    %v499 = vadd.f32 %v169, %v488
    %v500 = vadd.f32 %v172, %v491
    %v501 = vadd.f32 %v175, %v494
    %v502 = vadd.f32 %v178, %v497
    %v503 = vmax.f32 %v499, 0.0
    %v504 = vmax.f32 %v500, 0.0
    %v505 = vmax.f32 %v501, 0.0
    %v506 = vmax.f32 %v502, 0.0
    %s507 = scalar_lea.vmem [#allocation2], 192
    %v508 = vld [vmem:[%s507] sm:$0xff]
    %v509 = vld [vmem:[%s507 + $0x8] sm:$0xff]
    %v510 = vld [vmem:[%s507 + $0x10] sm:$0xff]
    %v511 = vld [vmem:[%s507 + $0x18] sm:$0xff]
    %v513 = vsel %vm54, %v508, 0
    %v516 = vsel %vm54, %v509, 0
    %v519 = vsel %vm54, %v510, 0
    %v522 = vsel %vm54, %v511, 0
    %524 = vmatpush.msra.mxu0 0.0
    %525 = vmatpush.msra.mxu0 0.0
    %526 = vmatpush.msra.mxu0 0.0
    %527 = vmatpush.msra.mxu0 0.0
    %528 = vmatpush.msra.mxu0 0.0
    %529 = vmatpush.msra.mxu0 0.0
    %530 = vmatpush.msra.mxu0 0.0
    %531 = vmatpush.msra.mxu0 0.0
    %532 = vmatpush.msra.mxu0 0.0
    %533 = vmatpush.msra.mxu0 0.0
    %534 = vmatpush.msra.mxu0 0.0
    %535 = vmatpush.msra.mxu0 0.0
    %536 = vmatpush.msra.mxu0 %v506
    %537 = vmatpush.msra.mxu0 %v505
    %538 = vmatpush.msra.mxu0 %v504
    %539 = vmatpush.msra.mxu0 %v503
    %540 = vmatmul.f32.gmra.mxu0 %v513
    %v541 = vpop.f32.mrf.mxu0
    %v542 = vadd.f32 0.0, %v541
    %543 = vmatmul.f32.gmra.mxu0 %v516
    %v544 = vpop.f32.mrf.mxu0
    %v545 = vadd.f32 0.0, %v544
    %546 = vmatmul.f32.gmra.mxu0 %v519
    %v547 = vpop.f32.mrf.mxu0
    %v548 = vadd.f32 0.0, %v547
    %549 = vmatmul.f32.gmra.mxu0 %v522
    %v550 = vpop.f32.mrf.mxu0
    %v551 = vadd.f32 0.0, %v550
    %552 = vdwg.mxu0
    %v553 = vmax.f32 %v542, 0.0
    %v554 = vmax.f32 %v545, 0.0
    %v555 = vmax.f32 %v548, 0.0
    %v556 = vmax.f32 %v551, 0.0
    %s557 = scalar_lea.vmem [#allocation2], 224
    %v558 = vld [vmem:[%s557] sm:$0xff]
    %v559 = vld [vmem:[%s557 + $0x8] sm:$0xff]
    %v560 = vld [vmem:[%s557 + $0x10] sm:$0xff]
    %v561 = vld [vmem:[%s557 + $0x18] sm:$0xff]
    %v563 = vsel %vm54, %v558, 0
    %v566 = vsel %vm54, %v559, 0
    %v569 = vsel %vm54, %v560, 0
    %v572 = vsel %vm54, %v561, 0
    %574 = vmatpush.msra.mxu0 0.0
    %575 = vmatpush.msra.mxu0 0.0
    %576 = vmatpush.msra.mxu0 0.0
    %577 = vmatpush.msra.mxu0 0.0
    %578 = vmatpush.msra.mxu0 0.0
    %579 = vmatpush.msra.mxu0 0.0
    %580 = vmatpush.msra.mxu0 0.0
    %581 = vmatpush.msra.mxu0 0.0
    %582 = vmatpush.msra.mxu0 0.0
    %583 = vmatpush.msra.mxu0 0.0
    %584 = vmatpush.msra.mxu0 0.0
    %585 = vmatpush.msra.mxu0 0.0
    %586 = vmatpush.msra.mxu0 %v556
    %587 = vmatpush.msra.mxu0 %v555
    %588 = vmatpush.msra.mxu0 %v554
    %589 = vmatpush.msra.mxu0 %v553
    %590 = vmatmul.f32.gmra.mxu0 %v563
    %v591 = vpop.f32.mrf.mxu0
    %v592 = vadd.f32 0.0, %v591
    %593 = vmatmul.f32.gmra.mxu0 %v566
    %v594 = vpop.f32.mrf.mxu0
    %v595 = vadd.f32 0.0, %v594
    %596 = vmatmul.f32.gmra.mxu0 %v569
    %v597 = vpop.f32.mrf.mxu0
    %v598 = vadd.f32 0.0, %v597
    %599 = vmatmul.f32.gmra.mxu0 %v572
    %v600 = vpop.f32.mrf.mxu0
    %v601 = vadd.f32 0.0, %v600
    %602 = vdwg.mxu0
    %v603 = vmax.f32 %v592, 0.0
    %v604 = vmax.f32 %v595, 0.0
    %v605 = vmax.f32 %v598, 0.0
    %v606 = vmax.f32 %v601, 0.0
    %s607 = scalar_lea.vmem [#allocation2], 256
    %v608 = vld [vmem:[%s607] sm:$0xff]
    %v609 = vld [vmem:[%s607 + $0x8] sm:$0xff]
    %v610 = vld [vmem:[%s607 + $0x10] sm:$0xff]
    %v611 = vld [vmem:[%s607 + $0x18] sm:$0xff]
    %v613 = vsel %vm54, %v608, 0
    %v616 = vsel %vm54, %v609, 0
    %v619 = vsel %vm54, %v610, 0
    %v622 = vsel %vm54, %v611, 0
    %624 = vmatpush.msra.mxu0 0.0
    %625 = vmatpush.msra.mxu0 0.0
    %626 = vmatpush.msra.mxu0 0.0
    %627 = vmatpush.msra.mxu0 0.0
    %628 = vmatpush.msra.mxu0 0.0
    %629 = vmatpush.msra.mxu0 0.0
    %630 = vmatpush.msra.mxu0 0.0
    %631 = vmatpush.msra.mxu0 0.0
    %632 = vmatpush.msra.mxu0 0.0
    %633 = vmatpush.msra.mxu0 0.0
    %634 = vmatpush.msra.mxu0 0.0
    %635 = vmatpush.msra.mxu0 0.0
    %636 = vmatpush.msra.mxu0 %v606
    %637 = vmatpush.msra.mxu0 %v605
    %638 = vmatpush.msra.mxu0 %v604
    %639 = vmatpush.msra.mxu0 %v603
    %640 = vmatmul.f32.gmra.mxu0 %v613
    %v641 = vpop.f32.mrf.mxu0
    %v642 = vadd.f32 0.0, %v641
    %643 = vmatmul.f32.gmra.mxu0 %v616
    %v644 = vpop.f32.mrf.mxu0
    %v645 = vadd.f32 0.0, %v644
    %646 = vmatmul.f32.gmra.mxu0 %v619
    %v647 = vpop.f32.mrf.mxu0
    %v648 = vadd.f32 0.0, %v647
    %649 = vmatmul.f32.gmra.mxu0 %v622
    %v650 = vpop.f32.mrf.mxu0
    %v651 = vadd.f32 0.0, %v650
    %652 = vdwg.mxu0
    %v653 = vtanh.pop %v642
    %v654 = vtanh.pop %v645
    %v655 = vtanh.pop %v648
    %v656 = vtanh.pop %v651
    %s657 = scalar_lea.vmem [#allocation2], 288
    %v658 = vld [vmem:[%s657] sm:$0xff]
    %v659 = vld [vmem:[%s657 + $0x8] sm:$0xff]
    %v660 = vld [vmem:[%s657 + $0x10] sm:$0xff]
    %v661 = vld [vmem:[%s657 + $0x18] sm:$0xff]
    %v663 = vsel %vm54, %v658, 0
    %v666 = vsel %vm54, %v659, 0
    %v669 = vsel %vm54, %v660, 0
    %v672 = vsel %vm54, %v661, 0
    %674 = vmatpush.msra.mxu0 0.0
    %675 = vmatpush.msra.mxu0 0.0
    %676 = vmatpush.msra.mxu0 0.0
    %677 = vmatpush.msra.mxu0 0.0
    %678 = vmatpush.msra.mxu0 0.0
    %679 = vmatpush.msra.mxu0 0.0
    %680 = vmatpush.msra.mxu0 0.0
    %681 = vmatpush.msra.mxu0 0.0
    %682 = vmatpush.msra.mxu0 0.0
    %683 = vmatpush.msra.mxu0 0.0
    %684 = vmatpush.msra.mxu0 0.0
    %685 = vmatpush.msra.mxu0 0.0
    %686 = vmatpush.msra.mxu0 %v656
    %687 = vmatpush.msra.mxu0 %v655
    %688 = vmatpush.msra.mxu0 %v654
    %689 = vmatpush.msra.mxu0 %v653
    %690 = vmatmul.f32.gmra.mxu0 %v663
    %v691 = vpop.f32.mrf.mxu0
    %v692 = vadd.f32 0.0, %v691
    %693 = vmatmul.f32.gmra.mxu0 %v666
    %v694 = vpop.f32.mrf.mxu0
    %v695 = vadd.f32 0.0, %v694
    %696 = vmatmul.f32.gmra.mxu0 %v669
    %v697 = vpop.f32.mrf.mxu0
    %v698 = vadd.f32 0.0, %v697
    %699 = vmatmul.f32.gmra.mxu0 %v672
    %v700 = vpop.f32.mrf.mxu0
    %v701 = vadd.f32 0.0, %v700
    %702 = vdwg.mxu0
    %v703 = vmax.f32 %v692, 0.0
    %v704 = vmax.f32 %v695, 0.0
    %v705 = vmax.f32 %v698, 0.0
    %v706 = vmax.f32 %v701, 0.0
    %s707 = scalar_lea.vmem [#allocation2], 320
    %v708 = vld [vmem:[%s707] sm:$0xff]
    %v709 = vld [vmem:[%s707 + $0x8] sm:$0xff]
    %v710 = vld [vmem:[%s707 + $0x10] sm:$0xff]
    %v711 = vld [vmem:[%s707 + $0x18] sm:$0xff]
    %v713 = vsel %vm54, %v708, 0
    %v716 = vsel %vm54, %v709, 0
    %v719 = vsel %vm54, %v710, 0
    %v722 = vsel %vm54, %v711, 0
    %724 = vmatpush.msra.mxu0 0.0
    %725 = vmatpush.msra.mxu0 0.0
    %726 = vmatpush.msra.mxu0 0.0
    %727 = vmatpush.msra.mxu0 0.0
    %728 = vmatpush.msra.mxu0 0.0
    %729 = vmatpush.msra.mxu0 0.0
    %730 = vmatpush.msra.mxu0 0.0
    %731 = vmatpush.msra.mxu0 0.0
    %732 = vmatpush.msra.mxu0 0.0
    %733 = vmatpush.msra.mxu0 0.0
    %734 = vmatpush.msra.mxu0 0.0
    %735 = vmatpush.msra.mxu0 0.0
    %736 = vmatpush.msra.mxu0 %v706
    %737 = vmatpush.msra.mxu0 %v705
    %738 = vmatpush.msra.mxu0 %v704
    %739 = vmatpush.msra.mxu0 %v703
    %740 = vmatmul.f32.gmra.mxu0 %v713
    %v741 = vpop.f32.mrf.mxu0
    %v742 = vadd.f32 0.0, %v741
    %743 = vmatmul.f32.gmra.mxu0 %v716
    %v744 = vpop.f32.mrf.mxu0
    %v745 = vadd.f32 0.0, %v744
    %746 = vmatmul.f32.gmra.mxu0 %v719
    %v747 = vpop.f32.mrf.mxu0
    %v748 = vadd.f32 0.0, %v747
    %749 = vmatmul.f32.gmra.mxu0 %v722
    %v750 = vpop.f32.mrf.mxu0
    %v751 = vadd.f32 0.0, %v750
    %752 = vdwg.mxu0
    %v753 = vtanh.pop %v742
    %v754 = vtanh.pop %v745
    %v755 = vtanh.pop %v748
    %v756 = vtanh.pop %v751
    %s757 = scalar_lea.vmem [#allocation2], 352
    %v758 = vld [vmem:[%s757] sm:$0xff]
    %v759 = vld [vmem:[%s757 + $0x8] sm:$0xff]
    %v760 = vld [vmem:[%s757 + $0x10] sm:$0xff]
    %v761 = vld [vmem:[%s757 + $0x18] sm:$0xff]
    %v763 = vsel %vm54, %v758, 0
    %v766 = vsel %vm54, %v759, 0
    %v769 = vsel %vm54, %v760, 0
    %v772 = vsel %vm54, %v761, 0
    %774 = vmatpush.msra.mxu0 0.0
    %775 = vmatpush.msra.mxu0 0.0
    %776 = vmatpush.msra.mxu0 0.0
    %777 = vmatpush.msra.mxu0 0.0
    %778 = vmatpush.msra.mxu0 0.0
    %779 = vmatpush.msra.mxu0 0.0
    %780 = vmatpush.msra.mxu0 0.0
    %781 = vmatpush.msra.mxu0 0.0
    %782 = vmatpush.msra.mxu0 0.0
    %783 = vmatpush.msra.mxu0 0.0
    %784 = vmatpush.msra.mxu0 0.0
    %785 = vmatpush.msra.mxu0 0.0
    %786 = vmatpush.msra.mxu0 %v756
    %787 = vmatpush.msra.mxu0 %v755
    %788 = vmatpush.msra.mxu0 %v754
    %789 = vmatpush.msra.mxu0 %v753
    %790 = vmatmul.f32.gmra.mxu0 %v763
    %v791 = vpop.f32.mrf.mxu0
    %v792 = vadd.f32 0.0, %v791
    %793 = vmatmul.f32.gmra.mxu0 %v766
    %v794 = vpop.f32.mrf.mxu0
    %v795 = vadd.f32 0.0, %v794
    %796 = vmatmul.f32.gmra.mxu0 %v769
    %v797 = vpop.f32.mrf.mxu0
    %v798 = vadd.f32 0.0, %v797
    %799 = vmatmul.f32.gmra.mxu0 %v772
    %v800 = vpop.f32.mrf.mxu0
    %v801 = vadd.f32 0.0, %v800
    %802 = vdwg.mxu0
    %v803 = vmax.f32 %v792, 0.0
    %v804 = vmax.f32 %v795, 0.0
    %v805 = vmax.f32 %v798, 0.0
    %v806 = vmax.f32 %v801, 0.0
    %s807 = scalar_lea.vmem [#allocation2], 384
    %v808 = vld [vmem:[%s807] sm:$0xff]
    %v809 = vld [vmem:[%s807 + $0x8] sm:$0xff]
    %v810 = vld [vmem:[%s807 + $0x10] sm:$0xff]
    %v811 = vld [vmem:[%s807 + $0x18] sm:$0xff]
    %v813 = vsel %vm54, %v808, 0
    %v816 = vsel %vm54, %v809, 0
    %v819 = vsel %vm54, %v810, 0
    %v822 = vsel %vm54, %v811, 0
    %824 = vmatpush.msra.mxu0 0.0
    %825 = vmatpush.msra.mxu0 0.0
    %826 = vmatpush.msra.mxu0 0.0
    %827 = vmatpush.msra.mxu0 0.0
    %828 = vmatpush.msra.mxu0 0.0
    %829 = vmatpush.msra.mxu0 0.0
    %830 = vmatpush.msra.mxu0 0.0
    %831 = vmatpush.msra.mxu0 0.0
    %832 = vmatpush.msra.mxu0 0.0
    %833 = vmatpush.msra.mxu0 0.0
    %834 = vmatpush.msra.mxu0 0.0
    %835 = vmatpush.msra.mxu0 0.0
    %836 = vmatpush.msra.mxu0 %v606
    %837 = vmatpush.msra.mxu0 %v605
    %838 = vmatpush.msra.mxu0 %v604
    %839 = vmatpush.msra.mxu0 %v603
    %840 = vmatmul.f32.gmra.mxu0 %v813
    %v841 = vpop.f32.mrf.mxu0
    %v842 = vadd.f32 0.0, %v841
    %843 = vmatmul.f32.gmra.mxu0 %v816
    %v844 = vpop.f32.mrf.mxu0
    %v845 = vadd.f32 0.0, %v844
    %846 = vmatmul.f32.gmra.mxu0 %v819
    %v847 = vpop.f32.mrf.mxu0
    %v848 = vadd.f32 0.0, %v847
    %849 = vmatmul.f32.gmra.mxu0 %v822
    %v850 = vpop.f32.mrf.mxu0
    %v851 = vadd.f32 0.0, %v850
    %852 = vdwg.mxu0
    %v853 = vadd.f32 %v181, %v842
    %v854 = vadd.f32 %v184, %v845
    %v855 = vadd.f32 %v187, %v848
    %v856 = vadd.f32 %v190, %v851
    %s857 = scalar_lea.vmem [#allocation2], 416
    %v858 = vld [vmem:[%s857] sm:$0xff]
    %v859 = vld [vmem:[%s857 + $0x8] sm:$0xff]
    %v860 = vld [vmem:[%s857 + $0x10] sm:$0xff]
    %v861 = vld [vmem:[%s857 + $0x18] sm:$0xff]
    %v863 = vsel %vm54, %v858, 0
    %v866 = vsel %vm54, %v859, 0
    %v869 = vsel %vm54, %v860, 0
    %v872 = vsel %vm54, %v861, 0
    %874 = vmatpush.msra.mxu0 0.0
    %875 = vmatpush.msra.mxu0 0.0
    %876 = vmatpush.msra.mxu0 0.0
    %877 = vmatpush.msra.mxu0 0.0
    %878 = vmatpush.msra.mxu0 0.0
    %879 = vmatpush.msra.mxu0 0.0
    %880 = vmatpush.msra.mxu0 0.0
    %881 = vmatpush.msra.mxu0 0.0
    %882 = vmatpush.msra.mxu0 0.0
    %883 = vmatpush.msra.mxu0 0.0
    %884 = vmatpush.msra.mxu0 0.0
    %885 = vmatpush.msra.mxu0 0.0
    %886 = vmatpush.msra.mxu0 %v706
    %887 = vmatpush.msra.mxu0 %v705
    %888 = vmatpush.msra.mxu0 %v704
    %889 = vmatpush.msra.mxu0 %v703
    %890 = vmatmul.f32.gmra.mxu0 %v863
    %v891 = vpop.f32.mrf.mxu0
    %v892 = vadd.f32 0.0, %v891
    %893 = vmatmul.f32.gmra.mxu0 %v866
    %v894 = vpop.f32.mrf.mxu0
    %v895 = vadd.f32 0.0, %v894
    %896 = vmatmul.f32.gmra.mxu0 %v869
    %v897 = vpop.f32.mrf.mxu0
    %v898 = vadd.f32 0.0, %v897
    %899 = vmatmul.f32.gmra.mxu0 %v872
    %v900 = vpop.f32.mrf.mxu0
    %v901 = vadd.f32 0.0, %v900
    %902 = vdwg.mxu0
    %v903 = vadd.f32 %v853, %v892
    %v904 = vadd.f32 %v854, %v895
    %v905 = vadd.f32 %v855, %v898
    %v906 = vadd.f32 %v856, %v901
    %s907 = scalar_lea.vmem [#allocation2], 448
    %v908 = vld [vmem:[%s907] sm:$0xff]
    %v909 = vld [vmem:[%s907 + $0x8] sm:$0xff]
    %v910 = vld [vmem:[%s907 + $0x10] sm:$0xff]
    %v911 = vld [vmem:[%s907 + $0x18] sm:$0xff]
    %v913 = vsel %vm54, %v908, 0
    %v916 = vsel %vm54, %v909, 0
    %v919 = vsel %vm54, %v910, 0
    %v922 = vsel %vm54, %v911, 0
    %924 = vmatpush.msra.mxu0 0.0
    %925 = vmatpush.msra.mxu0 0.0
    %926 = vmatpush.msra.mxu0 0.0
    %927 = vmatpush.msra.mxu0 0.0
    %928 = vmatpush.msra.mxu0 0.0
    %929 = vmatpush.msra.mxu0 0.0
    %930 = vmatpush.msra.mxu0 0.0
    %931 = vmatpush.msra.mxu0 0.0
    %932 = vmatpush.msra.mxu0 0.0
    %933 = vmatpush.msra.mxu0 0.0
    %934 = vmatpush.msra.mxu0 0.0
    %935 = vmatpush.msra.mxu0 0.0
    %936 = vmatpush.msra.mxu0 %v806
    %937 = vmatpush.msra.mxu0 %v805
    %938 = vmatpush.msra.mxu0 %v804
    %939 = vmatpush.msra.mxu0 %v803
    %940 = vmatmul.f32.gmra.mxu0 %v913
    %v941 = vpop.f32.mrf.mxu0
    %v942 = vadd.f32 0.0, %v941
    %943 = vmatmul.f32.gmra.mxu0 %v916
    %v944 = vpop.f32.mrf.mxu0
    %v945 = vadd.f32 0.0, %v944
    %946 = vmatmul.f32.gmra.mxu0 %v919
    %v947 = vpop.f32.mrf.mxu0
    %v948 = vadd.f32 0.0, %v947
    %949 = vmatmul.f32.gmra.mxu0 %v922
    %v950 = vpop.f32.mrf.mxu0
    %v951 = vadd.f32 0.0, %v950
    %952 = vdwg.mxu0
    %v953 = vadd.f32 %v903, %v942
    %v954 = vadd.f32 %v904, %v945
    %v955 = vadd.f32 %v905, %v948
    %v956 = vadd.f32 %v906, %v951
    %v957 = vmax.f32 %v953, 0.0
    %v958 = vmax.f32 %v954, 0.0
    %v959 = vmax.f32 %v955, 0.0
    %v960 = vmax.f32 %v956, 0.0
    %s961 = scalar_lea.vmem [#allocation2], 480
    %v962 = vld [vmem:[%s961] sm:$0xff]
    %v963 = vld [vmem:[%s961 + $0x8] sm:$0xff]
    %v964 = vld [vmem:[%s961 + $0x10] sm:$0xff]
    %v965 = vld [vmem:[%s961 + $0x18] sm:$0xff]
    %v967 = vsel %vm54, %v962, 0
    %v970 = vsel %vm54, %v963, 0
    %v973 = vsel %vm54, %v964, 0
    %v976 = vsel %vm54, %v965, 0
    %978 = vmatpush.msra.mxu0 0.0
    %979 = vmatpush.msra.mxu0 0.0
    %980 = vmatpush.msra.mxu0 0.0
    %981 = vmatpush.msra.mxu0 0.0
    %982 = vmatpush.msra.mxu0 0.0
    %983 = vmatpush.msra.mxu0 0.0
    %984 = vmatpush.msra.mxu0 0.0
    %985 = vmatpush.msra.mxu0 0.0
    %986 = vmatpush.msra.mxu0 0.0
    %987 = vmatpush.msra.mxu0 0.0
    %988 = vmatpush.msra.mxu0 0.0
    %989 = vmatpush.msra.mxu0 0.0
    %990 = vmatpush.msra.mxu0 %v960
    %991 = vmatpush.msra.mxu0 %v959
    %992 = vmatpush.msra.mxu0 %v958
    %993 = vmatpush.msra.mxu0 %v957
    %994 = vmatmul.f32.gmra.mxu0 %v967
    %v995 = vpop.f32.mrf.mxu0
    %v996 = vadd.f32 0.0, %v995
    %997 = vmatmul.f32.gmra.mxu0 %v970
    %v998 = vpop.f32.mrf.mxu0
    %999 = vmatmul.f32.gmra.mxu0 %v973
    %v1000 = vpop.f32.mrf.mxu0
    %1001 = vmatmul.f32.gmra.mxu0 %v976
    %v1002 = vpop.f32.mrf.mxu0
    %1003 = vdwg.mxu0
    %1004 = vst [vmem:[%s3] sm:$0xff] %v996
    // Predicated region
    $region18: #{pnet_forward.1} parent=1 // pred_check
      _
    $region19: #{pnet_forward.1} parent=1 // pred_check_branch
      %1006 = sbr.rel (0) target = $region21
    $region20: #{pnet_forward.1} parent=1 // pred_region
      _
    $region21: #{pnet_forward.1} parent=1 // pred_fallthru
      _
    // Predicated region
    $region22: #{pnet_forward.1} parent=1 // pred_check
      _
    $region23: #{pnet_forward.1} parent=1 // pred_check_branch
      %1008 = sbr.rel (0) target = $region25
    $region24: #{pnet_forward.1} parent=1 // pred_region
      _
    $region25: #{pnet_forward.1} parent=1 // pred_fallthru
      _
    %1009 = vsyncpa [#allocation3], 1

</llo_original>
